<compile_context>
chip_gen: v7x
topology: tpu7x:2x2x1
jax: 0.10.0
libtpu: 0.0.40
codegen_flags: <defaults>
</compile_context>

<pallas_src>
import functools

import jax
import jax.numpy as jnp
from jax.experimental import pallas as pl
from jax.experimental.pallas import tpu as pltpu

LANES = 128
SUB = 8


def _sublane_multiple(dtype):
    # Minimum second-minor block multiple for packed dtypes.
    itemsize = jnp.dtype(dtype).itemsize
    return {4: 8, 2: 16, 1: 32}.get(itemsize, 8)


def _round_up(x, m):
    return ((x + m - 1) // m) * m


def _default_num_shards():
    """Use 2 row-shards only on multi-TensorCore chips; 1 on v5e/v6e."""
    try:
        kind = jax.devices()[0].device_kind.lower()
    except Exception:
        return 1
    single_tc_tags = ("v2", "v3", "v5 lite", "v5e", "v6 lite", "v6e", "v6")
    if any(tag in kind for tag in single_tc_tags):
        return 1
    return 2


def _dice_tile_kernel(p_ref, t_ref, inter_ref, union_ref, *,
                      tile_rows, slice_rows, steps_per_shard, n_valid):
    """One (tile_rows, 128) tile: accumulate intersection / (p+t) union sums.

    Grid: (shard, step). The output blocks (index_map constant along `step`)
    stay resident in VMEM and act as the accumulators; they are zeroed at
    step 0 and written back automatically when the shard changes. The fold is
    a sliced loop so the full tile's p/t values are never all live at once.
    """
    shard = pl.program_id(0)
    step = pl.program_id(1)

    @pl.when(step == 0)
    def _():
        inter_ref[...] = jnp.zeros_like(inter_ref)
        union_ref[...] = jnp.zeros_like(union_ref)

    # Logical (unclamped) tile index -> global element range of this tile.
    tile_idx = shard * steps_per_shard + step
    tile_row0 = tile_idx * tile_rows
    tile_elem0 = tile_row0 * LANES
    tile_elem1 = tile_elem0 + tile_rows * LANES

    n_slices = tile_rows // slice_rows
    folds = slice_rows // SUB
    unroll = n_slices if n_slices <= 8 else 8

    def make_fold(masked):
        def body(j, carry):
            r0 = pl.multiple_of(j * slice_rows, slice_rows)
            p = p_ref[pl.ds(r0, slice_rows), :].astype(jnp.float32)
            t = t_ref[pl.ds(r0, slice_rows), :].astype(jnp.float32)
            # sigmoid as a single EUP push (matches XLA's logistic expansion).
            p = 0.5 * jnp.tanh(0.5 * p) + 0.5
            if masked:
                row_i = jax.lax.broadcasted_iota(jnp.int32, (slice_rows, LANES), 0)
                lane_i = jax.lax.broadcasted_iota(jnp.int32, (slice_rows, LANES), 1)
                elem = (tile_row0 + r0 + row_i) * LANES + lane_i
                valid = elem < n_valid
                p = jnp.where(valid, p, 0.0)
                t = jnp.where(valid, t, 0.0)
            # Fold (slice_rows, 128) onto the (8, 128) resident accumulators:
            # purely elementwise vreg adds (VPU), no cross-lane work.
            inter_ref[...] += (p * t).reshape(folds, SUB, LANES).sum(axis=0)
            union_ref[...] += (p + t).reshape(folds, SUB, LANES).sum(axis=0)
            return carry
        return body

    @pl.when(tile_elem1 <= n_valid)  # tile fully inside the valid prefix
    def _():
        jax.lax.fori_loop(0, n_slices, make_fold(False), 0, unroll=unroll)

    @pl.when(jnp.logical_and(tile_elem0 < n_valid, tile_elem1 > n_valid))
    def _():  # the single boundary tile: mask pad / OOB-garbage elements
        jax.lax.fori_loop(0, n_slices, make_fold(True), 0, unroll=unroll)
    # Tiles with tile_elem0 >= n_valid contribute nothing.


def dice_loss(preds, targets, smooth=1e-6, tile_rows=2048, num_row_shards=None):
    """Pallas TPU implementation of DiceLoss.forward (returns a scalar)."""
    if preds.shape != targets.shape:
        raise ValueError(
            f"Shape mismatch: preds shape {preds.shape} and targets shape "
            f"{targets.shape} must be identical.")

    n = int(preds.size)
    if n == 0:
        return jnp.float32(0.0)  # (2*0 + s) / (0 + s) = 1 -> loss 0

    if num_row_shards is None:
        num_row_shards = _default_num_shards()

    # Native dtypes all the way to the kernel (upcast happens in-register).
    p_flat = preds.reshape(-1)
    t_flat = targets.reshape(-1)

    n128 = _round_up(n, LANES)
    if n128 != n:
        # TODO(synk): only the <128-element tail needs padding; replace this
        # jnp.pad copy with a manual tail DMA (pl.ANY) if ragged sizes matter.
        # Pad values are irrelevant — the kernel masks all elements >= n.
        p_flat = jnp.pad(p_flat, (0, n128 - n))
        t_flat = jnp.pad(t_flat, (0, n128 - n))
    rows = n128 // LANES

    row_align = max(_sublane_multiple(p_flat.dtype), _sublane_multiple(t_flat.dtype))
    tile_rows = int(tile_rows)
    tile_rows = max(row_align, min(tile_rows, _round_up(rows, row_align)))
    tile_rows = _round_up(tile_rows, row_align)
    slice_rows = 64 if tile_rows % 64 == 0 else row_align

    p2d = p_flat.reshape(rows, LANES)   # layout-preserving, no data movement
    t2d = t_flat.reshape(rows, LANES)

    total_tiles = int(pl.cdiv(rows, tile_rows))
    num_row_shards = max(1, min(int(num_row_shards), total_tiles))
    steps = int(pl.cdiv(total_tiles, num_row_shards))

    def in_map(c, i):
        t = c * steps + i
        # Clamp so over-provisioned grid points never address an OOB block;
        # the kernel's element-range gate already makes them contribute 0.
        return (jnp.minimum(t, total_tiles - 1), 0)

    in_spec = pl.BlockSpec((tile_rows, LANES), in_map)
    out_spec = pl.BlockSpec((None, SUB, LANES), lambda c, i: (c, 0, 0))
    part_shape = jax.ShapeDtypeStruct((num_row_shards, SUB, LANES), jnp.float32)

    kernel = functools.partial(
        _dice_tile_kernel, tile_rows=tile_rows, slice_rows=slice_rows,
        steps_per_shard=steps, n_valid=n)

    inter_p, union_p = pl.pallas_call(
        kernel,
        out_shape=(part_shape, part_shape),
        grid_spec=pltpu.PrefetchScalarGridSpec(
            num_scalar_prefetch=0,
            grid=(num_row_shards, steps),
            in_specs=[in_spec, in_spec],
            out_specs=[out_spec, out_spec],
        ),
        compiler_params=pltpu.CompilerParams(
            dimension_semantics=("parallel", "arbitrary")),
    )(p2d, t2d)

    # Tiny epilogue (2 * num_row_shards * 1024 floats) in plain JAX.
    intersection = jnp.sum(inter_p)
    union = jnp.sum(union_p)
    dice = (2.0 * intersection + smooth) / (union + smooth)
    return 1.0 - dice


def _dice_loss_ref(preds, targets, smooth=1e-6):
    """Pure-JAX reference matching the PyTorch forward exactly."""
    p = jax.nn.sigmoid(preds.astype(jnp.float32)).reshape(-1)
    t = targets.astype(jnp.float32).reshape(-1)
    inter = jnp.sum(p * t)
    union = jnp.sum(p) + jnp.sum(t)
    return 1.0 - (2.0 * inter + smooth) / (union + smooth)


if __name__ == "__main__":
    key = jax.random.PRNGKey(0)
    k1, k2, k3, k4, k5, k6 = jax.random.split(key, 6)

    # preds: raw logits, shape (batch, 1, H, W); targets: binary mask.
    preds = jax.random.normal(k1, (2, 1, 16, 16), dtype=jnp.float32)
    targets = (jax.random.uniform(k2, (2, 1, 16, 16)) > 0.5).astype(jnp.float32)
    loss = jax.block_until_ready(dice_loss(preds, targets))
    ref = _dice_loss_ref(preds, targets)
    assert jnp.allclose(loss, ref, atol=1e-5, rtol=1e-5), (loss, ref)

    # Multi-tile reduction path (several grid steps, sliced in-tile fold).
    preds2 = jax.random.normal(k3, (2, 1, 64, 64), dtype=jnp.float32)
    targets2 = (jax.random.uniform(k4, (2, 1, 64, 64)) > 0.5).astype(jnp.float32)
    loss2 = jax.block_until_ready(dice_loss(preds2, targets2, tile_rows=16))
    ref2 = _dice_loss_ref(preds2, targets2)
    assert jnp.allclose(loss2, ref2, atol=1e-5, rtol=1e-5), (loss2, ref2)

    # Ragged size (n % 128 != 0) with bf16 logits: exercises the in-kernel
    # element mask on the boundary tile and the in-register dtype upcast.
    preds3 = jax.random.normal(k5, (1, 1, 40, 50), dtype=jnp.bfloat16)
    targets3 = (jax.random.uniform(k6, (1, 1, 40, 50)) > 0.5).astype(jnp.float32)
    loss3 = jax.block_until_ready(dice_loss(preds3, targets3))
    ref3 = _dice_loss_ref(preds3, targets3)
    assert jnp.allclose(loss3, ref3, atol=1e-4, rtol=1e-4), (loss3, ref3)

    print("KERNEL_OK")
</pallas_src>

<mosaic_0001>
module attributes {stable_mosaic.version = 11 : i64} {
  func.func @_dice_tile_kernel(%arg0: i32, %arg1: i32, %arg2: memref<8x128xf32, #tpu.memory_space<vmem>>, %arg3: memref<8x128xf32, #tpu.memory_space<vmem>>, %arg4: memref<1x8x128xf32, #tpu.memory_space<vmem>>, %arg5: memref<1x8x128xf32, #tpu.memory_space<vmem>>) attributes {dimension_semantics = [#tpu.dimension_semantics<parallel>, #tpu.dimension_semantics<arbitrary>], iteration_bounds = array<i64: 1, 1>, scalar_prefetch = 0 : i64, scratch_operands = 0 : i64, tpu.core_type = #tpu.core_type<tc>, window_params = [{transform_indices = @transform_0, window_bounds = array<i64: 8, 128>}, {transform_indices = @transform_1, window_bounds = array<i64: 8, 128>}, {transform_indices = @transform_2, window_bounds = array<i64: 1, 8, 128>}, {transform_indices = @transform_3, window_bounds = array<i64: 1, 8, 128>}]} {
    %c0_i32 = arith.constant 0 : i32
    %0 = arith.cmpi eq, %arg1, %c0_i32 : i32
    %1 = arith.extui %0 : i1 to i32
    %c0_i32_0 = arith.constant 0 : i32
    %2 = arith.cmpi ne, %1, %c0_i32_0 : i32
    scf.if %2 {
      %cst = arith.constant 0.000000e+00 : f32
      %16 = vector.broadcast %cst : f32 to vector<8x128xf32>
      %c0 = arith.constant 0 : index
      %c0_5 = arith.constant 0 : index
      %c0_6 = arith.constant 0 : index
      %17 = vector.load %arg4[%c0, %c0_5, %c0_6] : memref<1x8x128xf32, #tpu.memory_space<vmem>>, vector<1x8x128xf32>
      %18 = vector.shape_cast %17 : vector<1x8x128xf32> to vector<8x128xf32>
      %19 = vector.shape_cast %16 : vector<8x128xf32> to vector<1x8x128xf32>
      tpu.vector_store %arg4[%c0, %c0_5, %c0_6], %19 {strides = array<i32>} : memref<1x8x128xf32, #tpu.memory_space<vmem>>, vector<1x8x128xf32>,
      %cst_7 = arith.constant 0.000000e+00 : f32
      %20 = vector.broadcast %cst_7 : f32 to vector<8x128xf32>
      %c0_8 = arith.constant 0 : index
      %c0_9 = arith.constant 0 : index
      %c0_10 = arith.constant 0 : index
      %21 = vector.load %arg5[%c0_8, %c0_9, %c0_10] : memref<1x8x128xf32, #tpu.memory_space<vmem>>, vector<1x8x128xf32>
      %22 = vector.shape_cast %21 : vector<1x8x128xf32> to vector<8x128xf32>
      %23 = vector.shape_cast %20 : vector<8x128xf32> to vector<1x8x128xf32>
      tpu.vector_store %arg5[%c0_8, %c0_9, %c0_10], %23 {strides = array<i32>} : memref<1x8x128xf32, #tpu.memory_space<vmem>>, vector<1x8x128xf32>,
    } else {
    }
    %c1_i32 = arith.constant 1 : i32
    %3 = arith.muli %arg0, %c1_i32 : i32
    %4 = arith.addi %3, %arg1 : i32
    %c8_i32 = arith.constant 8 : i32
    %5 = arith.muli %4, %c8_i32 : i32
    %c128_i32 = arith.constant 128 : i32
    %6 = arith.muli %5, %c128_i32 : i32
    %c1024_i32 = arith.constant 1024 : i32
    %7 = arith.addi %6, %c1024_i32 : i32
    %c512_i32 = arith.constant 512 : i32
    %8 = arith.cmpi sle, %7, %c512_i32 : i32
    %9 = arith.extui %8 : i1 to i32
    %c0_i32_1 = arith.constant 0 : i32
    %10 = arith.cmpi ne, %9, %c0_i32_1 : i32
    scf.if %10 {
      %c0_i32_5 = arith.constant 0 : i32
      %c8_i32_6 = arith.constant 8 : i32
      %16 = arith.muli %c0_i32_5, %c8_i32_6 : i32
      %17 = tpu.assume_multiple %16, 8 : i32
      %18 = arith.index_cast %17 : i32 to index
      %c0 = arith.constant 0 : index
      %19 = vector.load %arg2[%18, %c0] : memref<8x128xf32, #tpu.memory_space<vmem>>, vector<8x128xf32>
      %20 = arith.index_cast %17 : i32 to index
      %c0_7 = arith.constant 0 : index
      %21 = vector.load %arg3[%20, %c0_7] : memref<8x128xf32, #tpu.memory_space<vmem>>, vector<8x128xf32>
      %cst = arith.constant 5.000000e-01 : f32
      %22 = vector.broadcast %cst : f32 to vector<8x128xf32>
      %23 = arith.mulf %22, %19 : vector<8x128xf32>
      %24 = math.tanh %23 : vector<8x128xf32>
      %cst_8 = arith.constant 5.000000e-01 : f32
      %25 = vector.broadcast %cst_8 : f32 to vector<8x128xf32>
      %26 = arith.mulf %25, %24 : vector<8x128xf32>
      %cst_9 = arith.constant 5.000000e-01 : f32
      %27 = vector.broadcast %cst_9 : f32 to vector<8x128xf32>
      %28 = arith.addf %26, %27 : vector<8x128xf32>
      %c0_10 = arith.constant 0 : index
      %c0_11 = arith.constant 0 : index
      %c0_12 = arith.constant 0 : index
      %29 = vector.load %arg4[%c0_10, %c0_11, %c0_12] : memref<1x8x128xf32, #tpu.memory_space<vmem>>, vector<1x8x128xf32>
      %30 = vector.shape_cast %29 : vector<1x8x128xf32> to vector<8x128xf32>
      %31 = arith.mulf %28, %21 : vector<8x128xf32>
      %32 = vector.shape_cast %31 : vector<8x128xf32> to vector<1x8x128xf32>
      %cst_13 = arith.constant dense<0.000000e+00> : vector<8x128xf32>
      %33 = vector.multi_reduction <add>, %32, %cst_13 [0] : vector<1x8x128xf32> to vector<8x128xf32>
      %34 = arith.addf %30, %33 : vector<8x128xf32>
      %c0_14 = arith.constant 0 : index
      %c0_15 = arith.constant 0 : index
      %c0_16 = arith.constant 0 : index
      %35 = vector.load %arg4[%c0_14, %c0_15, %c0_16] : memref<1x8x128xf32, #tpu.memory_space<vmem>>, vector<1x8x128xf32>
      %36 = vector.shape_cast %35 : vector<1x8x128xf32> to vector<8x128xf32>
      %37 = vector.shape_cast %34 : vector<8x128xf32> to vector<1x8x128xf32>
      tpu.vector_store %arg4[%c0_14, %c0_15, %c0_16], %37 {strides = array<i32>} : memref<1x8x128xf32, #tpu.memory_space<vmem>>, vector<1x8x128xf32>,
      %c0_17 = arith.constant 0 : index
      %c0_18 = arith.constant 0 : index
      %c0_19 = arith.constant 0 : index
      %38 = vector.load %arg5[%c0_17, %c0_18, %c0_19] : memref<1x8x128xf32, #tpu.memory_space<vmem>>, vector<1x8x128xf32>
      %39 = vector.shape_cast %38 : vector<1x8x128xf32> to vector<8x128xf32>
      %40 = arith.addf %28, %21 : vector<8x128xf32>
      %41 = vector.shape_cast %40 : vector<8x128xf32> to vector<1x8x128xf32>
      %cst_20 = arith.constant dense<0.000000e+00> : vector<8x128xf32>
      %42 = vector.multi_reduction <add>, %41, %cst_20 [0] : vector<1x8x128xf32> to vector<8x128xf32>
      %43 = arith.addf %39, %42 : vector<8x128xf32>
      %c0_21 = arith.constant 0 : index
      %c0_22 = arith.constant 0 : index
      %c0_23 = arith.constant 0 : index
      %44 = vector.load %arg5[%c0_21, %c0_22, %c0_23] : memref<1x8x128xf32, #tpu.memory_space<vmem>>, vector<1x8x128xf32>
      %45 = vector.shape_cast %44 : vector<1x8x128xf32> to vector<8x128xf32>
      %46 = vector.shape_cast %43 : vector<8x128xf32> to vector<1x8x128xf32>
      tpu.vector_store %arg5[%c0_21, %c0_22, %c0_23], %46 {strides = array<i32>} : memref<1x8x128xf32, #tpu.memory_space<vmem>>, vector<1x8x128xf32>,
      %c1_i32_24 = arith.constant 1 : i32
    } else {
    }
    %c512_i32_2 = arith.constant 512 : i32
    %11 = arith.cmpi slt, %6, %c512_i32_2 : i32
    %c512_i32_3 = arith.constant 512 : i32
    %12 = arith.cmpi sgt, %7, %c512_i32_3 : i32
    %13 = arith.andi %11, %12 : i1
    %14 = arith.extui %13 : i1 to i32
    %c0_i32_4 = arith.constant 0 : i32
    %15 = arith.cmpi ne, %14, %c0_i32_4 : i32
    scf.if %15 {
      %c0_i32_5 = arith.constant 0 : i32
      %c8_i32_6 = arith.constant 8 : i32
      %16 = arith.muli %c0_i32_5, %c8_i32_6 : i32
      %17 = tpu.assume_multiple %16, 8 : i32
      %18 = arith.index_cast %17 : i32 to index
      %c0 = arith.constant 0 : index
      %19 = vector.load %arg2[%18, %c0] : memref<8x128xf32, #tpu.memory_space<vmem>>, vector<8x128xf32>
      %20 = arith.index_cast %17 : i32 to index
      %c0_7 = arith.constant 0 : index
      %21 = vector.load %arg3[%20, %c0_7] : memref<8x128xf32, #tpu.memory_space<vmem>>, vector<8x128xf32>
      %cst = arith.constant 5.000000e-01 : f32
      %22 = vector.broadcast %cst : f32 to vector<8x128xf32>
      %23 = arith.mulf %22, %19 : vector<8x128xf32>
      %24 = math.tanh %23 : vector<8x128xf32>
      %cst_8 = arith.constant 5.000000e-01 : f32
      %25 = vector.broadcast %cst_8 : f32 to vector<8x128xf32>
      %26 = arith.mulf %25, %24 : vector<8x128xf32>
      %cst_9 = arith.constant 5.000000e-01 : f32
      %27 = vector.broadcast %cst_9 : f32 to vector<8x128xf32>
      %28 = arith.addf %26, %27 : vector<8x128xf32>
      %29 = tpu.iota {dimensions = array<i32: 0>} : vector<8x128xi32>
      %30 = tpu.iota {dimensions = array<i32: 1>} : vector<8x128xi32>
      %31 = arith.addi %5, %17 : i32
      %32 = vector.broadcast %31 : i32 to vector<8x128xi32>
      %33 = arith.addi %32, %29 : vector<8x128xi32>
      %c128_i32_10 = arith.constant 128 : i32
      %34 = vector.broadcast %c128_i32_10 : i32 to vector<8x128xi32>
      %35 = arith.muli %33, %34 : vector<8x128xi32>
      %36 = arith.addi %35, %30 : vector<8x128xi32>
      %c512_i32_11 = arith.constant 512 : i32
      %37 = vector.broadcast %c512_i32_11 : i32 to vector<8x128xi32>
      %38 = arith.cmpi slt, %36, %37 : vector<8x128xi32>
      %cst_12 = arith.constant 0.000000e+00 : f32
      %39 = vector.broadcast %cst_12 : f32 to vector<8x128xf32>
      %40 = arith.select %38, %28, %39 : vector<8x128xi1>, vector<8x128xf32>
      %cst_13 = arith.constant 0.000000e+00 : f32
      %41 = vector.broadcast %cst_13 : f32 to vector<8x128xf32>
      %42 = arith.select %38, %21, %41 : vector<8x128xi1>, vector<8x128xf32>
      %c0_14 = arith.constant 0 : index
      %c0_15 = arith.constant 0 : index
      %c0_16 = arith.constant 0 : index
      %43 = vector.load %arg4[%c0_14, %c0_15, %c0_16] : memref<1x8x128xf32, #tpu.memory_space<vmem>>, vector<1x8x128xf32>
      %44 = vector.shape_cast %43 : vector<1x8x128xf32> to vector<8x128xf32>
      %45 = arith.mulf %40, %42 : vector<8x128xf32>
      %46 = vector.shape_cast %45 : vector<8x128xf32> to vector<1x8x128xf32>
      %cst_17 = arith.constant dense<0.000000e+00> : vector<8x128xf32>
      %47 = vector.multi_reduction <add>, %46, %cst_17 [0] : vector<1x8x128xf32> to vector<8x128xf32>
      %48 = arith.addf %44, %47 : vector<8x128xf32>
      %c0_18 = arith.constant 0 : index
      %c0_19 = arith.constant 0 : index
      %c0_20 = arith.constant 0 : index
      %49 = vector.load %arg4[%c0_18, %c0_19, %c0_20] : memref<1x8x128xf32, #tpu.memory_space<vmem>>, vector<1x8x128xf32>
      %50 = vector.shape_cast %49 : vector<1x8x128xf32> to vector<8x128xf32>
      %51 = vector.shape_cast %48 : vector<8x128xf32> to vector<1x8x128xf32>
      tpu.vector_store %arg4[%c0_18, %c0_19, %c0_20], %51 {strides = array<i32>} : memref<1x8x128xf32, #tpu.memory_space<vmem>>, vector<1x8x128xf32>,
      %c0_21 = arith.constant 0 : index
      %c0_22 = arith.constant 0 : index
      %c0_23 = arith.constant 0 : index
      %52 = vector.load %arg5[%c0_21, %c0_22, %c0_23] : memref<1x8x128xf32, #tpu.memory_space<vmem>>, vector<1x8x128xf32>
      %53 = vector.shape_cast %52 : vector<1x8x128xf32> to vector<8x128xf32>
      %54 = arith.addf %40, %42 : vector<8x128xf32>
      %55 = vector.shape_cast %54 : vector<8x128xf32> to vector<1x8x128xf32>
      %cst_24 = arith.constant dense<0.000000e+00> : vector<8x128xf32>
      %56 = vector.multi_reduction <add>, %55, %cst_24 [0] : vector<1x8x128xf32> to vector<8x128xf32>
      %57 = arith.addf %53, %56 : vector<8x128xf32>
      %c0_25 = arith.constant 0 : index
      %c0_26 = arith.constant 0 : index
      %c0_27 = arith.constant 0 : index
      %58 = vector.load %arg5[%c0_25, %c0_26, %c0_27] : memref<1x8x128xf32, #tpu.memory_space<vmem>>, vector<1x8x128xf32>
      %59 = vector.shape_cast %58 : vector<1x8x128xf32> to vector<8x128xf32>
      %60 = vector.shape_cast %57 : vector<8x128xf32> to vector<1x8x128xf32>
      tpu.vector_store %arg5[%c0_25, %c0_26, %c0_27], %60 {strides = array<i32>} : memref<1x8x128xf32, #tpu.memory_space<vmem>>, vector<1x8x128xf32>,
      %c1_i32_28 = arith.constant 1 : i32
    } else {
    }
    return
  }
  func.func @transform_0(%arg0: i32, %arg1: i32) -> (i32, i32) {
    %c1_i32 = arith.constant 1 : i32
    %0 = arith.muli %arg0, %c1_i32 : i32
    %1 = arith.addi %0, %arg1 : i32
    %c0_i32 = arith.constant 0 : i32
    %2 = arith.minsi %1, %c0_i32 : i32
    %c0_i32_0 = arith.constant 0 : i32
    %c0_i32_1 = arith.constant 0 : i32
    return %2, %c0_i32_0 : i32, i32
  }
  func.func @transform_1(%arg0: i32, %arg1: i32) -> (i32, i32) {
    %c1_i32 = arith.constant 1 : i32
    %0 = arith.muli %arg0, %c1_i32 : i32
    %1 = arith.addi %0, %arg1 : i32
    %c0_i32 = arith.constant 0 : i32
    %2 = arith.minsi %1, %c0_i32 : i32
    %c0_i32_0 = arith.constant 0 : i32
    %c0_i32_1 = arith.constant 0 : i32
    return %2, %c0_i32_0 : i32, i32
  }
  func.func @transform_2(%arg0: i32, %arg1: i32) -> (i32, i32, i32) {
    %c0_i32 = arith.constant 0 : i32
    %c0_i32_0 = arith.constant 0 : i32
    %c0_i32_1 = arith.constant 0 : i32
    return %arg0, %c0_i32, %c0_i32_0 : i32, i32, i32
  }
  func.func @transform_3(%arg0: i32, %arg1: i32) -> (i32, i32, i32) {
    %c0_i32 = arith.constant 0 : i32
    %c0_i32_0 = arith.constant 0 : i32
    %c0_i32_1 = arith.constant 0 : i32
    return %arg0, %c0_i32, %c0_i32_0 : i32, i32, i32
  }
}

</mosaic_0001>

<llo_original>
// kernel: tpu_custom_call.1
$region0: #{tpu_custom_call.1}
  #allocation0 [shape = 'u32[]', space=smem, size = 0x4, offset = 0x4, fixed_abs, tag = 'smem constant byte address 0x4 - core index']
  #allocation1 [shape = 'u32[144,128]{1,0:T(1,128)}', space=vmem, size = 0x12000, scoped, tag = 'internal scratch']
  %s0 = inlined_call_operand.hbm [shape: f32[4,128], index: 0, kind: input, shape index: {}]
  %s1 = inlined_call_operand.hbm [shape: f32[4,128], index: 1, kind: input, shape index: {}]
  %s2 = inlined_call_operand.hbm [shape: f32[1,8,128], index: 2, kind: output, shape index: {0}]
  %s3 = inlined_call_operand.hbm [shape: f32[1,8,128], index: 3, kind: output, shape index: {1}]
  %4 = xla_tuple %s2, %s3
  %s5 = sld [smem:[#allocation0]]
  $region46: #{tpu_custom_call.1} parent=0
    _
  %s7 = ssub.s32 1, %s5
  %s8 = scalar_select 0, %s7, %s5
  $region1: #{tpu_custom_call.1} parent=0
    #allocation2 [shape = 'u8[4096]{0}', space=vmem, size = 0x1000, scoped, tag = 'input window, operand 0, single buffered']
    #allocation3 [shape = 's32[1]{0}', space=sflag, size = 0x4, scoped, tag = 'scoped memory for tpu_custom_call.1']
    #allocation4 [shape = 's32[1]{0}', space=sflag, size = 0x4, scoped, tag = 'scoped memory for tpu_custom_call.1']
    #allocation5 [shape = 'u8[4096]{0}', space=vmem, size = 0x1000, scoped, tag = 'input window, operand 1, single buffered']
    #allocation6 [shape = 's32[1]{0}', space=sflag, size = 0x4, scoped, tag = 'scoped memory for tpu_custom_call.1']
    #allocation7 [shape = 'u8[4096]{0}', space=vmem, size = 0x1000, scoped, tag = 'output window, operand 0, single buffered']
    #allocation8 [shape = 'u8[4096]{0}', space=vmem, size = 0x1000, scoped, tag = 'output window, operand 1, single buffered']
    #allocation9 [shape = 's32[1]{0}', space=sflag, size = 0x4, scoped, tag = 'scoped memory for tpu_custom_call.1']
    %9 = vsyncpa [#allocation3], 0
    %10 = vsyncpa [#allocation6], 0
    %11 = vsyncpa [#allocation4], 0
    %12 = vsyncpa [#allocation9], 0
    // Predicated region
    $region2: #{tpu_custom_call.1} parent=1 // pred_check
      _
    $region3: #{tpu_custom_call.1} parent=1 // pred_check_branch
      %14 = sbr.rel (0) target = $region5
    $region4: #{tpu_custom_call.1} parent=1 // pred_region
      %s15 = sadd.s32 0, 0
      %p16 = scmp.lt.s32.totalorder %s15, 0
      %s17 = scalar_select %p16, %s15, 0
      %s18 = smul.u32 2, %s17
      %s19 = ssub.s32 1, %s18
      %s20 = smul.u32 64, %s19
      %s22 = ssub.s32 128, %s20
      %23 = vsyncadd [#allocation3], %s22
      %p24 = scmp.ne.s32.totalorder 0, %s20
      %s25 = smul.addr %s18, 64
      %s26 = scalar_lea.hbm %s0, %s25
      %s27 = smul.u32 4, %s19
      %s28 = sshll.u32 [#allocation2], 4
      %s29 = int_to_ptr.vmem [resolvable:$true] %s28
      %s30 = sshll.u32 %s27, 4
      %34 = dma.hbm_to_vmem [thread:$0]  (%p24), %s26, %s30, %s29, [#allocation3], 64, 64, 4
    $region5: #{tpu_custom_call.1} parent=1 // pred_fallthru
      _
    // Predicated region
    $region6: #{tpu_custom_call.1} parent=1 // pred_check
      _
    $region7: #{tpu_custom_call.1} parent=1 // pred_check_branch
      %36 = sbr.rel (0) target = $region9
    $region8: #{tpu_custom_call.1} parent=1 // pred_region
      %s37 = sadd.s32 0, 0
      %p38 = scmp.lt.s32.totalorder %s37, 0
      %s39 = scalar_select %p38, %s37, 0
      %s40 = smul.u32 2, %s39
      %s41 = ssub.s32 1, %s40
      %s42 = smul.u32 64, %s41
      %s44 = ssub.s32 128, %s42
      %45 = vsyncadd [#allocation6], %s44
      %p46 = scmp.ne.s32.totalorder 0, %s42
      %s47 = smul.addr %s40, 64
      %s48 = scalar_lea.hbm %s1, %s47
      %s49 = smul.u32 4, %s41
      %s50 = sshll.u32 [#allocation5], 4
      %s51 = int_to_ptr.vmem [resolvable:$true] %s50
      %s52 = sshll.u32 %s49, 4
      %56 = dma.hbm_to_vmem [thread:$0]  (%p46), %s48, %s52, %s51, [#allocation6], 64, 64, 4
    $region9: #{tpu_custom_call.1} parent=1 // pred_fallthru
      _
    // Predicated region
    $region10: #{tpu_custom_call.1} parent=1 // pred_check
      _
    $region11: #{tpu_custom_call.1} parent=1 // pred_check_branch
      %58 = sbr.rel (0) target = $region13
    $region12: #{tpu_custom_call.1} parent=1 // pred_region
      %59 = dma.done [#allocation3], 128
    $region13: #{tpu_custom_call.1} parent=1 // pred_fallthru
      _
    // Predicated region
    $region14: #{tpu_custom_call.1} parent=1 // pred_check
      _
    $region15: #{tpu_custom_call.1} parent=1 // pred_check_branch
      %61 = sbr.rel (0) target = $region17
    $region16: #{tpu_custom_call.1} parent=1 // pred_region
      %62 = dma.done [#allocation6], 128
    $region17: #{tpu_custom_call.1} parent=1 // pred_fallthru
      _
    %s63 = sadd.s32 0, 0
    %p64 = scmp.lt.s32.totalorder %s63, 0
    %s65 = scalar_select %p64, %s63, 0
    %s66 = smul.u32 2, %s65
    %s67 = ssub.s32 1, %s66
    %s68 = smul.u32 64, %s67
    %s69 = sadd.s32 0, 0
    %p70 = scmp.lt.s32.totalorder %s69, 0
    %s71 = scalar_select %p70, %s69, 0
    %s72 = smul.u32 2, %s71
    %s73 = ssub.s32 1, %s72
    %s74 = smul.u32 64, %s73
    %p75 = scmp.eq.s32.totalorder 0, 0
    // Predicated region
    $region18: #{tpu_custom_call.1} parent=1 // pred_check
      %p76 = pneg %p75
    $region19: #{tpu_custom_call.1} parent=1 // pred_check_branch
      %78 = sbr.rel (%p76) target = $region21
    $region20: #{tpu_custom_call.1} parent=1 // pred_region
      %79 = vst [vmem:[#allocation7] sm:$0xff] 0.0
      %80 = vst [vmem:[#allocation8] sm:$0xff] 0.0
    $region21: #{tpu_custom_call.1} parent=1 // pred_fallthru
      _
    %s81 = sadd.s32 0, 0
    %s82 = smul.u32 %s81, 8
    %s83 = smul.u32 %s81, 1024
    %s84 = sadd.s32 %s83, 1024
    %p85 = scmp.le.s32.totalorder %s84, 512
    // Predicated region
    $region22: #{tpu_custom_call.1} parent=1 // pred_check
      %p86 = pneg %p85
    $region23: #{tpu_custom_call.1} parent=1 // pred_check_branch
      %88 = sbr.rel (%p86) target = $region25
    $region24: #{tpu_custom_call.1} parent=1 // pred_region
      %v89 = vld [vmem:[#allocation2] sm:$0xff]
      %v90 = vld [vmem:[#allocation5] sm:$0xff]
      %v91 = vmul.f32 %v89, 0.5
      %v92 = vtanh.pop %v91
      %v93 = vmul.f32 %v92, 0.5
      %v94 = vadd.f32 %v93, 0.5
      %v95 = vld [vmem:[#allocation7] sm:$0xff]
      %v96 = vmul.f32 %v94, %v90
      %v97 = vadd.f32 %v96, 0.0
      %v98 = vadd.f32 %v95, %v97
      %99 = vst [vmem:[#allocation7] sm:$0xff] %v98
      %v100 = vld [vmem:[#allocation8] sm:$0xff]
      %v101 = vadd.f32 %v94, %v90
      %v102 = vadd.f32 %v101, 0.0
      %v103 = vadd.f32 %v100, %v102
      %104 = vst [vmem:[#allocation8] sm:$0xff] %v103
    $region25: #{tpu_custom_call.1} parent=1 // pred_fallthru
      _
    %p105 = scmp.lt.s32.totalorder %s83, 512
    %p106 = scmp.gt.s32.totalorder %s84, 512
    %p107 = pnand %p105, %p106
    %p108 = pneg %p107
    // Predicated region
    $region26: #{tpu_custom_call.1} parent=1 // pred_check
      _
    $region27: #{tpu_custom_call.1} parent=1 // pred_check_branch
      %110 = sbr.rel (%p107) target = $region29
    $region28: #{tpu_custom_call.1} parent=1 // pred_region
      %v111 = vld [vmem:[#allocation2] sm:$0xff]
      %v112 = vld [vmem:[#allocation5] sm:$0xff]
      %v113 = vmul.f32 %v111, 0.5
      %v114 = vtanh.pop %v113
      %v115 = vmul.f32 %v114, 0.5
      %v116 = vadd.f32 %v115, 0.5
      %v117 = vlaneseq
      %v118 = vshrl.u32 %v117, 7
      %v119 = vlaneseq
      %v120 = vand.u32 %v119, 127
      %s121 = sadd.s32 %s82, 0
      %v122 = vstv %s121
      %v123 = vadd.s32 %v122, %v118
      %v124 = vmul.u32 %v123, 128
      %v125 = vadd.s32 %v124, %v120
      %vm126 = vcmp.lt.s32.totalorder %v125, 512
      %v127 = vsel %vm126, %v116, 0.0
      %v128 = vsel %vm126, %v112, 0.0
      %v129 = vld [vmem:[#allocation7] sm:$0xff]
      %v130 = vmul.f32 %v127, %v128
      %v131 = vadd.f32 %v130, 0.0
      %v132 = vadd.f32 %v129, %v131
      %133 = vst [vmem:[#allocation7] sm:$0xff] %v132
      %v134 = vld [vmem:[#allocation8] sm:$0xff]
      %v135 = vadd.f32 %v127, %v128
      %v136 = vadd.f32 %v135, 0.0
      %v137 = vadd.f32 %v134, %v136
      %138 = vst [vmem:[#allocation8] sm:$0xff] %v137
    $region29: #{tpu_custom_call.1} parent=1 // pred_fallthru
      _
    // Predicated region
    $region30: #{tpu_custom_call.1} parent=1 // pred_check
      _
    $region31: #{tpu_custom_call.1} parent=1 // pred_check_branch
      %140 = sbr.rel (0) target = $region33
    $region32: #{tpu_custom_call.1} parent=1 // pred_region
      %s142 = ssub.s32 128, 128
      %143 = vsyncadd [#allocation4], %s142
      %s145 = sshll.u32 [#allocation7], 4
      %s146 = int_to_ptr.vmem [resolvable:$true] %s145
      %148 = dma.vmem_to_hbm [thread:$0]  %s146, 128, %s2, [#allocation4]
    $region33: #{tpu_custom_call.1} parent=1 // pred_fallthru
      _
    // Predicated region
    $region34: #{tpu_custom_call.1} parent=1 // pred_check
      _
    $region35: #{tpu_custom_call.1} parent=1 // pred_check_branch
      %150 = sbr.rel (0) target = $region37
    $region36: #{tpu_custom_call.1} parent=1 // pred_region
      %s152 = ssub.s32 128, 128
      %153 = vsyncadd [#allocation9], %s152
      %s155 = sshll.u32 [#allocation8], 4
      %s156 = int_to_ptr.vmem [resolvable:$true] %s155
      %158 = dma.vmem_to_hbm [thread:$0]  %s156, 128, %s3, [#allocation9]
    $region37: #{tpu_custom_call.1} parent=1 // pred_fallthru
      _
    // Predicated region
    $region38: #{tpu_custom_call.1} parent=1 // pred_check
      _
    $region39: #{tpu_custom_call.1} parent=1 // pred_check_branch
      %160 = sbr.rel (0) target = $region41
    $region40: #{tpu_custom_call.1} parent=1 // pred_region
      %161 = dma.done [#allocation4], 128
    $region41: #{tpu_custom_call.1} parent=1 // pred_fallthru
      _
    // Predicated region
    $region42: #{tpu_custom_call.1} parent=1 // pred_check
      _
    $region43: #{tpu_custom_call.1} parent=1 // pred_check_branch
      %163 = sbr.rel (0) target = $region45
    $region44: #{tpu_custom_call.1} parent=1 // pred_region
      %164 = dma.done [#allocation9], 128
    $region45: #{tpu_custom_call.1} parent=1 // pred_fallthru
      _
    %165 = vsyncpa [#allocation3], 1
    %166 = vsyncpa [#allocation6], 1
    %167 = vsyncpa [#allocation4], 1
    %168 = vsyncpa [#allocation9], 1

</llo_original>
